<compile_context>
chip_gen: v7x
topology: tpu7x:2x2x1
jax: 0.10.0
libtpu: 0.0.40
codegen_flags: <defaults>
</compile_context>

<pallas_src>
import functools

import jax
import jax.numpy as jnp
from jax.experimental import pallas as pl
from jax.experimental.pallas import tpu as pltpu


def _round_up(x, m):
    return (x + m - 1) // m * m


def _mlp_mse_kernel(*refs, block_n, n_actual, n_padded, has_weight, n_hidden):
    """One batch tile: MLP forward + (optionally weighted) squared-error sum."""
    idx = 0
    x_ref = refs[idx]; idx += 1
    y_ref = refs[idx]; idx += 1
    w_ref = None
    if has_weight:
        w_ref = refs[idx]; idx += 1

    h = x_ref[...]
    for _ in range(n_hidden):
        w_r = refs[idx]; b_r = refs[idx + 1]; idx += 2
        h = jnp.dot(h.astype(w_r.dtype), w_r[...],
                    preferred_element_type=jnp.float32)
        h = jnp.maximum(h + b_r[...], 0.0)

    wo_r = refs[idx]; bo_r = refs[idx + 1]; idx += 2   # wo_r is [1, H_last]
    out_ref = refs[idx]

    # Degenerate [H_last, 1] matmul -> VPU multiply + lane reduction (XLU),
    # avoiding a 1-wide MXU result column (127/128 of the lanes wasted).
    yhat = jnp.sum(h * wo_r[...], axis=-1, keepdims=True) + bo_r[...]  # [bn, 1]

    diff = yhat - y_ref[...]
    loss = diff * diff
    if has_weight:
        loss = loss * w_ref[...]

    if n_padded != n_actual:  # static: mask rows added by batch padding
        row = (pl.program_id(0) * block_n
               + jax.lax.broadcasted_iota(jnp.int32, (block_n, 1), 0))
        loss = jnp.where(row < n_actual, loss, 0.0)

    total = jnp.sum(loss)
    # Per-grid-step partial sum written to a lane-dense block; wrapper sums.
    out_ref[...] = jnp.full(out_ref.shape, total, dtype=out_ref.dtype)


def net_forward(x, y, params, weight_=None, size_average=False,
                block_n=512, use_bf16=False):
    """Pallas implementation of Net.forward for lossFnc='mse'.

    params: flat tuple (W1, b1, ..., Wk, bk, Wout, bout) with W as
    [in_features, out_features] and b as [1, out_features].
    """
    n, _ = x.shape
    n_elems = y.size
    n_hidden = len(params) // 2 - 1

    hidden_ws = list(params[: 2 * n_hidden])
    wo, bo = params[2 * n_hidden], params[2 * n_hidden + 1]
    wo_row = jnp.transpose(wo)  # [1, H_last] for the VPU mul + lane reduce

    if use_bf16:
        x = x.astype(jnp.bfloat16)
        for i in range(0, 2 * n_hidden, 2):          # cast W only, keep b f32
            hidden_ws[i] = hidden_ws[i].astype(jnp.bfloat16)

    # Batch tiling: biggest block that makes sense, sublane-aligned (mult of 8).
    block_n = max(8, min(block_n, _round_up(n, 8)))
    n_pad = _round_up(n, block_n)
    if n_pad != n:
        x = jnp.pad(x, ((0, n_pad - n), (0, 0)))
        y = jnp.pad(y, ((0, n_pad - n), (0, 0)))
        if weight_ is not None:
            weight_ = jnp.pad(weight_, ((0, n_pad - n), (0, 0)))
    grid_n = n_pad // block_n

    has_weight = weight_ is not None
    data = [x, y] + ([weight_] if has_weight else [])
    weights = hidden_ws + [wo_row, bo]

    def batch_spec(a):
        nd = a.ndim
        return pl.BlockSpec((block_n,) + a.shape[1:],
                            lambda i: (i,) + (0,) * (nd - 1))

    def resident_spec(a):
        nd = a.ndim
        return pl.BlockSpec(a.shape, lambda i: (0,) * nd)

    kernel = functools.partial(
        _mlp_mse_kernel, block_n=block_n, n_actual=n, n_padded=n_pad,
        has_weight=has_weight, n_hidden=n_hidden)

    partials = pl.pallas_call(
        kernel,
        out_shape=jax.ShapeDtypeStruct((grid_n, 8, 128), jnp.float32),
        grid=(grid_n,),
        in_specs=[batch_spec(a) for a in data]
                 + [resident_spec(w) for w in weights],
        out_specs=pl.BlockSpec((1, 8, 128), lambda i: (i, 0, 0)),
        compiler_params=pltpu.CompilerParams(
            dimension_semantics=("parallel",)),
    )(*data, *weights)

    total = jnp.sum(partials[:, 0, 0])
    if size_average:
        total = total / jnp.float32(n_elems)
    return total


def init_params(key, feature, hidden):
    """PyTorch-Linear-style init: U(-1/sqrt(fan_in), 1/sqrt(fan_in))."""
    dims = [feature] + list(hidden) + [1]
    params = []
    for i in range(len(dims) - 1):
        fan_in, fan_out = dims[i], dims[i + 1]
        key, kw, kb = jax.random.split(key, 3)
        bound = 1.0 / jnp.sqrt(fan_in)
        w = jax.random.uniform(kw, (fan_in, fan_out), jnp.float32, -bound, bound)
        b = jax.random.uniform(kb, (1, fan_out), jnp.float32, -bound, bound)
        params.extend([w, b])
    return tuple(params)


def net_forward_ref(x, y, params, weight_=None, size_average=False):
    """Pure-JAX reference for correctness checking."""
    n_hidden = len(params) // 2 - 1
    h = x
    for i in range(n_hidden):
        h = jnp.maximum(h @ params[2 * i] + params[2 * i + 1], 0.0)
    yhat = h @ params[2 * n_hidden] + params[2 * n_hidden + 1]
    loss = (yhat - y) ** 2
    if weight_ is not None:
        loss = loss * weight_
    return loss.mean() if size_average else loss.sum()


if __name__ == "__main__":
    F = 32
    HIDDEN = [64, 32]

    key = jax.random.PRNGKey(0)
    kx, ky, kw, kp, kx2, ky2 = jax.random.split(key, 6)
    params = init_params(kp, F, HIDDEN)

    # --- small case (N=16): default, weighted, size_average -----------------
    N = 16
    x = jax.random.normal(kx, (N, F), jnp.float32)
    y = jax.random.normal(ky, (N, 1), jnp.float32)
    w = jax.random.uniform(kw, (N, 1), jnp.float32)

    loss = jax.block_until_ready(net_forward(x, y, params))
    ref = net_forward_ref(x, y, params)
    assert jnp.allclose(loss, ref, rtol=1e-5, atol=1e-5), (loss, ref)

    loss_w = jax.block_until_ready(net_forward(x, y, params, weight_=w))
    ref_w = net_forward_ref(x, y, params, weight_=w)
    assert jnp.allclose(loss_w, ref_w, rtol=1e-5, atol=1e-5), (loss_w, ref_w)

    loss_a = jax.block_until_ready(
        net_forward(x, y, params, weight_=w, size_average=True))
    ref_a = net_forward_ref(x, y, params, weight_=w, size_average=True)
    assert jnp.allclose(loss_a, ref_a, rtol=1e-5, atol=1e-5), (loss_a, ref_a)

    # --- tiled case (N not a multiple of the block): exercises grid + mask ---
    N2 = 300
    x2 = jax.random.normal(kx2, (N2, F), jnp.float32)
    y2 = jax.random.normal(ky2, (N2, 1), jnp.float32)
    loss2 = jax.block_until_ready(net_forward(x2, y2, params, block_n=128))
    ref2 = net_forward_ref(x2, y2, params)
    assert jnp.allclose(loss2, ref2, rtol=1e-4, atol=1e-3), (loss2, ref2)

    # --- bf16 MXU path (v6e/v7x); loose tolerance per review ----------------
    loss_bf = jax.block_until_ready(
        net_forward(x2, y2, params, block_n=128, use_bf16=True))
    assert jnp.allclose(loss_bf, ref2, rtol=1e-1, atol=1e-1), (loss_bf, ref2)

    print("KERNEL_OK")
</pallas_src>

<mosaic_0001>
module attributes {stable_mosaic.version = 11 : i64} {
  func.func @_mlp_mse_kernel(%arg0: i32, %arg1: memref<16x32xf32, #tpu.memory_space<vmem>>, %arg2: memref<16x1xf32, #tpu.memory_space<vmem>>, %arg3: memref<32x64xf32, #tpu.memory_space<vmem>>, %arg4: memref<1x64xf32, #tpu.memory_space<vmem>>, %arg5: memref<64x32xf32, #tpu.memory_space<vmem>>, %arg6: memref<1x32xf32, #tpu.memory_space<vmem>>, %arg7: memref<1x32xf32, #tpu.memory_space<vmem>>, %arg8: memref<1x1xf32, #tpu.memory_space<vmem>>, %arg9: memref<1x8x128xf32, #tpu.memory_space<vmem>>) attributes {dimension_semantics = [#tpu.dimension_semantics<parallel>], iteration_bounds = array<i64: 1>, scalar_prefetch = 0 : i64, scratch_operands = 0 : i64, tpu.core_type = #tpu.core_type<tc>, window_params = [{transform_indices = @transform_0, window_bounds = array<i64: 16, 32>}, {transform_indices = @transform_1, window_bounds = array<i64: 16, 1>}, {pipeline_mode = #tpu.pipeline_mode<synchronous>, transform_indices = @transform_2, window_bounds = array<i64: 32, 64>}, {pipeline_mode = #tpu.pipeline_mode<synchronous>, transform_indices = @transform_3, window_bounds = array<i64: 1, 64>}, {pipeline_mode = #tpu.pipeline_mode<synchronous>, transform_indices = @transform_4, window_bounds = array<i64: 64, 32>}, {pipeline_mode = #tpu.pipeline_mode<synchronous>, transform_indices = @transform_5, window_bounds = array<i64: 1, 32>}, {pipeline_mode = #tpu.pipeline_mode<synchronous>, transform_indices = @transform_6, window_bounds = array<i64: 1, 32>}, {pipeline_mode = #tpu.pipeline_mode<synchronous>, transform_indices = @transform_7, window_bounds = array<i64: 1, 1>}, {transform_indices = @transform_8, window_bounds = array<i64: 1, 8, 128>}]} {
    %c0 = arith.constant 0 : index
    %c0_0 = arith.constant 0 : index
    %0 = vector.load %arg1[%c0, %c0_0] : memref<16x32xf32, #tpu.memory_space<vmem>>, vector<16x32xf32>
    %c0_1 = arith.constant 0 : index
    %c0_2 = arith.constant 0 : index
    %1 = vector.load %arg3[%c0_1, %c0_2] : memref<32x64xf32, #tpu.memory_space<vmem>>, vector<32x64xf32>
    %cst = arith.constant dense<0.000000e+00> : vector<16x64xf32>
    %2 = tpu.matmul %0, %1, %cst {dimension_numbers = #tpu.dot_dimension_numbers<[1], [0], [0], [1], [0, 0, 1, 1], [], []>} : vector<16x32xf32>, vector<32x64xf32>, vector<16x64xf32> -> vector<16x64xf32>
    %c0_3 = arith.constant 0 : index
    %c0_4 = arith.constant 0 : index
    %3 = vector.load %arg4[%c0_3, %c0_4] : memref<1x64xf32, #tpu.memory_space<vmem>>, vector<1x64xf32>
    %4 = vector.broadcast %3 : vector<1x64xf32> to vector<16x64xf32>
    %5 = arith.addf %2, %4 : vector<16x64xf32>
    %cst_5 = arith.constant 0.000000e+00 : f32
    %6 = vector.broadcast %cst_5 : f32 to vector<16x64xf32>
    %7 = arith.maximumf %5, %6 : vector<16x64xf32>
    %c0_6 = arith.constant 0 : index
    %c0_7 = arith.constant 0 : index
    %8 = vector.load %arg5[%c0_6, %c0_7] : memref<64x32xf32, #tpu.memory_space<vmem>>, vector<64x32xf32>
    %cst_8 = arith.constant dense<0.000000e+00> : vector<16x32xf32>
    %9 = tpu.matmul %7, %8, %cst_8 {dimension_numbers = #tpu.dot_dimension_numbers<[1], [0], [0], [1], [0, 0, 1, 1], [], []>} : vector<16x64xf32>, vector<64x32xf32>, vector<16x32xf32> -> vector<16x32xf32>
    %c0_9 = arith.constant 0 : index
    %c0_10 = arith.constant 0 : index
    %10 = vector.load %arg6[%c0_9, %c0_10] : memref<1x32xf32, #tpu.memory_space<vmem>>, vector<1x32xf32>
    %11 = vector.broadcast %10 : vector<1x32xf32> to vector<16x32xf32>
    %12 = arith.addf %9, %11 : vector<16x32xf32>
    %cst_11 = arith.constant 0.000000e+00 : f32
    %13 = vector.broadcast %cst_11 : f32 to vector<16x32xf32>
    %14 = arith.maximumf %12, %13 : vector<16x32xf32>
    %c0_12 = arith.constant 0 : index
    %c0_13 = arith.constant 0 : index
    %15 = vector.load %arg7[%c0_12, %c0_13] : memref<1x32xf32, #tpu.memory_space<vmem>>, vector<1x32xf32>
    %16 = vector.broadcast %15 : vector<1x32xf32> to vector<16x32xf32>
    %17 = arith.mulf %14, %16 : vector<16x32xf32>
    %cst_14 = arith.constant dense<0.000000e+00> : vector<16xf32>
    %18 = vector.multi_reduction <add>, %17, %cst_14 [1] : vector<16x32xf32> to vector<16xf32>
    %19 = vector.shape_cast %18 : vector<16xf32> to vector<16x1xf32>
    %c0_15 = arith.constant 0 : index
    %c0_16 = arith.constant 0 : index
    %20 = vector.load %arg8[%c0_15, %c0_16] : memref<1x1xf32, #tpu.memory_space<vmem>>, vector<1x1xf32>
    %21 = vector.broadcast %20 : vector<1x1xf32> to vector<16x1xf32>
    %22 = arith.addf %19, %21 : vector<16x1xf32>
    %c0_17 = arith.constant 0 : index
    %c0_18 = arith.constant 0 : index
    %23 = vector.load %arg2[%c0_17, %c0_18] : memref<16x1xf32, #tpu.memory_space<vmem>>, vector<16x1xf32>
    %24 = arith.subf %22, %23 : vector<16x1xf32>
    %25 = arith.mulf %24, %24 : vector<16x1xf32>
    %26 = vector.shape_cast %25 : vector<16x1xf32> to vector<1x16x1xf32>
    %cst_19 = arith.constant dense<0.000000e+00> : vector<1xf32>
    %27 = vector.multi_reduction <add>, %26, %cst_19 [1, 2] : vector<1x16x1xf32> to vector<1xf32>
    %28 = vector.shape_cast %27 : vector<1xf32> to vector<1x1x1xf32>
    %29 = vector.extract %28[0, 0, 0] : f32 from vector<1x1x1xf32>
    %30 = vector.broadcast %29 : f32 to vector<1x8x128xf32>
    %c0_20 = arith.constant 0 : index
    %c0_21 = arith.constant 0 : index
    %c0_22 = arith.constant 0 : index
    %31 = vector.load %arg9[%c0_20, %c0_21, %c0_22] : memref<1x8x128xf32, #tpu.memory_space<vmem>>, vector<1x8x128xf32>
    tpu.vector_store %arg9[%c0_20, %c0_21, %c0_22], %30 {strides = array<i32>} : memref<1x8x128xf32, #tpu.memory_space<vmem>>, vector<1x8x128xf32>,
    return
  }
  func.func @transform_0(%arg0: i32) -> (i32, i32) {
    %c0_i32 = arith.constant 0 : i32
    %c0_i32_0 = arith.constant 0 : i32
    return %arg0, %c0_i32 : i32, i32
  }
  func.func @transform_1(%arg0: i32) -> (i32, i32) {
    %c0_i32 = arith.constant 0 : i32
    %c0_i32_0 = arith.constant 0 : i32
    return %arg0, %c0_i32 : i32, i32
  }
  func.func @transform_2(%arg0: i32) -> (i32, i32) {
    %c0_i32 = arith.constant 0 : i32
    %c0_i32_0 = arith.constant 0 : i32
    %c0_i32_1 = arith.constant 0 : i32
    return %c0_i32, %c0_i32_0 : i32, i32
  }
  func.func @transform_3(%arg0: i32) -> (i32, i32) {
    %c0_i32 = arith.constant 0 : i32
    %c0_i32_0 = arith.constant 0 : i32
    %c0_i32_1 = arith.constant 0 : i32
    return %c0_i32, %c0_i32_0 : i32, i32
  }
  func.func @transform_4(%arg0: i32) -> (i32, i32) {
    %c0_i32 = arith.constant 0 : i32
    %c0_i32_0 = arith.constant 0 : i32
    %c0_i32_1 = arith.constant 0 : i32
    return %c0_i32, %c0_i32_0 : i32, i32
  }
  func.func @transform_5(%arg0: i32) -> (i32, i32) {
    %c0_i32 = arith.constant 0 : i32
    %c0_i32_0 = arith.constant 0 : i32
    %c0_i32_1 = arith.constant 0 : i32
    return %c0_i32, %c0_i32_0 : i32, i32
  }
  func.func @transform_6(%arg0: i32) -> (i32, i32) {
    %c0_i32 = arith.constant 0 : i32
    %c0_i32_0 = arith.constant 0 : i32
    %c0_i32_1 = arith.constant 0 : i32
    return %c0_i32, %c0_i32_0 : i32, i32
  }
  func.func @transform_7(%arg0: i32) -> (i32, i32) {
    %c0_i32 = arith.constant 0 : i32
    %c0_i32_0 = arith.constant 0 : i32
    %c0_i32_1 = arith.constant 0 : i32
    return %c0_i32, %c0_i32_0 : i32, i32
  }
  func.func @transform_8(%arg0: i32) -> (i32, i32, i32) {
    %c0_i32 = arith.constant 0 : i32
    %c0_i32_0 = arith.constant 0 : i32
    %c0_i32_1 = arith.constant 0 : i32
    return %arg0, %c0_i32, %c0_i32_0 : i32, i32, i32
  }
}

</mosaic_0001>

<llo_original>
// kernel: tpu_custom_call.1
$region0: #{tpu_custom_call.1}
  #allocation0 [shape = 'u32[]', space=smem, size = 0x4, offset = 0x4, fixed_abs, tag = 'smem constant byte address 0x4 - core index']
  #allocation1 [shape = 'u32[144,128]{1,0:T(1,128)}', space=vmem, size = 0x12000, scoped, tag = 'internal scratch']
  #allocation2 [shape = 'f32[1,1]{1,0:T(1,128)S(1)}', space=vmem, size = 0x200, scoped, tag = 'scoped memory for tpu_custom_call.1']
  %s0 = inlined_call_operand.vmem [shape: f32[16,32], index: 0, kind: input, shape index: {}]
  %s1 = inlined_call_operand.vmem [shape: f32[16,1], index: 1, kind: input, shape index: {}]
  %s2 = inlined_call_operand.vmem [shape: f32[32,64], index: 2, kind: input, shape index: {}]
  %s3 = inlined_call_operand.vmem [shape: f32[1,64], index: 3, kind: input, shape index: {}]
  %s4 = inlined_call_operand.vmem [shape: f32[64,32], index: 4, kind: input, shape index: {}]
  %s5 = inlined_call_operand.vmem [shape: f32[1,32], index: 5, kind: input, shape index: {}]
  %s6 = inlined_call_operand.vmem [shape: f32[1,32], index: 6, kind: input, shape index: {}]
  %s7 = inlined_call_operand.<no memory space> [shape: f32[1,1], index: 7, kind: input, shape index: {}]
  %s8 = inlined_call_operand.hbm [shape: f32[1,8,128], index: 8, kind: output, shape index: {}]
  %s9 = sld [smem:[#allocation0]]
  $region42: #{tpu_custom_call.1} parent=0
    _
  %s11 = ssub.s32 1, %s9
  %s12 = scalar_select 0, %s11, %s9
  %v13 = vstv %s7
  %14 = vst [vmem:[#allocation2] sm:$0x1] %v13
  $region1: #{tpu_custom_call.1} parent=0
    #allocation3 [shape = 'u8[4096]{0}', space=vmem, size = 0x1000, scoped, tag = 'output window, operand 0, single buffered']
    #allocation4 [shape = 's32[1]{0}', space=sflag, size = 0x4, scoped, tag = 'scoped memory for tpu_custom_call.1']
    %15 = vsyncpa [#allocation4], 0
    // Predicated region
    $region2: #{tpu_custom_call.1} parent=1 // pred_check
      _
    $region3: #{tpu_custom_call.1} parent=1 // pred_check_branch
      %17 = sbr.rel (0) target = $region5
    $region4: #{tpu_custom_call.1} parent=1 // pred_region
      _
    $region5: #{tpu_custom_call.1} parent=1 // pred_fallthru
      _
    // Predicated region
    $region6: #{tpu_custom_call.1} parent=1 // pred_check
      _
    $region7: #{tpu_custom_call.1} parent=1 // pred_check_branch
      %19 = sbr.rel (0) target = $region9
    $region8: #{tpu_custom_call.1} parent=1 // pred_region
      _
    $region9: #{tpu_custom_call.1} parent=1 // pred_fallthru
      _
    // Predicated region
    $region10: #{tpu_custom_call.1} parent=1 // pred_check
      _
    $region11: #{tpu_custom_call.1} parent=1 // pred_check_branch
      %21 = sbr.rel (0) target = $region13
    $region12: #{tpu_custom_call.1} parent=1 // pred_region
      _
    $region13: #{tpu_custom_call.1} parent=1 // pred_fallthru
      _
    // Predicated region
    $region14: #{tpu_custom_call.1} parent=1 // pred_check
      _
    $region15: #{tpu_custom_call.1} parent=1 // pred_check_branch
      %23 = sbr.rel (0) target = $region17
    $region16: #{tpu_custom_call.1} parent=1 // pred_region
      _
    $region17: #{tpu_custom_call.1} parent=1 // pred_fallthru
      _
    // Predicated region
    $region18: #{tpu_custom_call.1} parent=1 // pred_check
      _
    $region19: #{tpu_custom_call.1} parent=1 // pred_check_branch
      %25 = sbr.rel (0) target = $region21
    $region20: #{tpu_custom_call.1} parent=1 // pred_region
      _
    $region21: #{tpu_custom_call.1} parent=1 // pred_fallthru
      _
    // Predicated region
    $region22: #{tpu_custom_call.1} parent=1 // pred_check
      _
    $region23: #{tpu_custom_call.1} parent=1 // pred_check_branch
      %27 = sbr.rel (0) target = $region25
    $region24: #{tpu_custom_call.1} parent=1 // pred_region
      _
    $region25: #{tpu_custom_call.1} parent=1 // pred_fallthru
      _
    // Predicated region
    $region26: #{tpu_custom_call.1} parent=1 // pred_check
      _
    $region27: #{tpu_custom_call.1} parent=1 // pred_check_branch
      %29 = sbr.rel (0) target = $region29
    $region28: #{tpu_custom_call.1} parent=1 // pred_region
      _
    $region29: #{tpu_custom_call.1} parent=1 // pred_fallthru
      _
    // Predicated region
    $region30: #{tpu_custom_call.1} parent=1 // pred_check
      _
    $region31: #{tpu_custom_call.1} parent=1 // pred_check_branch
      %31 = sbr.rel (0) target = $region33
    $region32: #{tpu_custom_call.1} parent=1 // pred_region
      _
    $region33: #{tpu_custom_call.1} parent=1 // pred_fallthru
      _
    %v32 = vld [vmem:[%s0] sm:$0xff]
    %v33 = vld [vmem:[%s0 + $0x8] sm:$0xff]
    %v34 = vld [vmem:[%s2] sm:$0xff]
    %v35 = vld [vmem:[%s2 + $0x8] sm:$0xff]
    %v36 = vld [vmem:[%s2 + $0x10] sm:$0xff]
    %v37 = vld [vmem:[%s2 + $0x18] sm:$0xff]
    %v38 = vld [vmem:[%s3] sm:$0x1]
    %v40 = vlaneseq
    %v41 = vshrl.u32 %v40, 7
    %v42 = vsub.s32 0, %v41
    %v43 = vrot.slane %v38, %v42
    %vm45 = vcmask 261120
    %v47 = vsel %vm45, %v32, 0
    %v50 = vsel %vm45, %v33, 0
    %52 = vmatprep.subr.mxu0 0.0
    %53 = vmatpush1.msra.mxu0 %v34
    %54 = vmatprep.subr.mxu0 0.0
    %55 = vmatpush1.msra.mxu0 %v35
    %56 = vmatprep.subr.mxu0 0.0
    %57 = vmatpush1.msra.mxu0 %v36
    %58 = vmatprep.subr.mxu0 0.0
    %59 = vmatpush1.msra.mxu0 %v37
    %60 = vmatprep.subr.mxu0 0.0
    %61 = vmatpush1.msra.mxu0 0.0
    %62 = vmatprep.subr.mxu0 0.0
    %63 = vmatpush1.msra.mxu0 0.0
    %64 = vmatprep.subr.mxu0 0.0
    %65 = vmatpush1.msra.mxu0 0.0
    %66 = vmatprep.subr.mxu0 0.0
    %67 = vmatpush1.msra.mxu0 0.0
    %68 = vmatprep.subr.mxu0 0.0
    %69 = vmatpush1.msra.mxu0 0.0
    %70 = vmatprep.subr.mxu0 0.0
    %71 = vmatpush1.msra.mxu0 0.0
    %72 = vmatprep.subr.mxu0 0.0
    %73 = vmatpush1.msra.mxu0 0.0
    %74 = vmatprep.subr.mxu0 0.0
    %75 = vmatpush1.msra.mxu0 0.0
    %76 = vmatprep.subr.mxu0 0.0
    %77 = vmatpush1.msra.mxu0 0.0
    %78 = vmatprep.subr.mxu0 0.0
    %79 = vmatpush1.msra.mxu0 0.0
    %80 = vmatprep.subr.mxu0 0.0
    %81 = vmatpush1.msra.mxu0 0.0
    %82 = vmatprep.subr.mxu0 0.0
    %83 = vmatpush1.msra.mxu0 0.0
    %84 = vmatprep.subr.mxu0 0.0
    %85 = vmatpush1.msra.mxu0 0.0
    %86 = vmatprep.subr.mxu0 0.0
    %87 = vmatpush1.msra.mxu0 0.0
    %88 = vmatprep.subr.mxu0 0.0
    %89 = vmatpush1.msra.mxu0 0.0
    %90 = vmatprep.subr.mxu0 0.0
    %91 = vmatpush1.msra.mxu0 0.0
    %92 = vmatprep.subr.mxu0 0.0
    %93 = vmatpush1.msra.mxu0 0.0
    %94 = vmatprep.subr.mxu0 0.0
    %95 = vmatpush1.msra.mxu0 0.0
    %96 = vmatprep.subr.mxu0 0.0
    %97 = vmatpush1.msra.mxu0 0.0
    %98 = vmatprep.subr.mxu0 0.0
    %99 = vmatpush1.msra.mxu0 0.0
    %100 = vmatprep.subr.mxu0 0.0
    %101 = vmatpush1.msra.mxu0 0.0
    %102 = vmatprep.subr.mxu0 0.0
    %103 = vmatpush1.msra.mxu0 0.0
    %104 = vmatprep.subr.mxu0 0.0
    %105 = vmatpush1.msra.mxu0 0.0
    %106 = vmatprep.subr.mxu0 0.0
    %107 = vmatpush1.msra.mxu0 0.0
    %108 = vmatprep.subr.mxu0 0.0
    %109 = vmatpush1.msra.mxu0 0.0
    %110 = vmatprep.subr.mxu0 0.0
    %111 = vmatpush1.msra.mxu0 0.0
    %112 = vmatprep.subr.mxu0 0.0
    %113 = vmatpush1.msra.mxu0 0.0
    %114 = vmatprep.subr.mxu0 0.0
    %115 = vmatpush1.msra.mxu0 0.0
    %116 = vmatprep.mubr.f32.mxu0 0.0
    %117 = vmatmul.mubr.f32.gmra.mrb[0].mxu0 %v47
    %v118 = vpop.f32.mrb[0].mxu0
    %v119 = vadd.f32 %v43, %v118
    %v120 = vpop.f32.mrb[0].mxu0
    %121 = vmatprep.mubr.f32.mxu0 0.0
    %122 = vmatmul.mubr.f32.gmra.mrb[0].mxu0 %v50
    %v123 = vpop.f32.mrb[0].mxu0
    %v124 = vadd.f32 %v43, %v123
    %v125 = vpop.f32.mrb[0].mxu0
    %126 = vdwg.mxu0
    %v127 = vmax.f32 %v119, 0.0
    %v128 = vmax.f32 %v124, 0.0
    %v129 = vld [vmem:[%s4] sm:$0xff]
    %v130 = vld [vmem:[%s4 + $0x8] sm:$0xff]
    %v131 = vld [vmem:[%s4 + $0x10] sm:$0xff]
    %v132 = vld [vmem:[%s4 + $0x18] sm:$0xff]
    %v133 = vld [vmem:[%s4 + $0x20] sm:$0xff]
    %v134 = vld [vmem:[%s4 + $0x28] sm:$0xff]
    %v135 = vld [vmem:[%s4 + $0x30] sm:$0xff]
    %v136 = vld [vmem:[%s4 + $0x38] sm:$0xff]
    %v137 = vld [vmem:[%s5] sm:$0x1]
    %v139 = vlaneseq
    %v140 = vshrl.u32 %v139, 7
    %v141 = vsub.s32 0, %v140
    %v142 = vrot.slane %v137, %v141
    %vm144 = vcmask 523264
    %v146 = vsel %vm144, %v127, 0
    %v149 = vsel %vm144, %v128, 0
    %151 = vmatprep.subr.mxu0 0.0
    %152 = vmatpush1.msra.mxu0 %v129
    %153 = vmatprep.subr.mxu0 0.0
    %154 = vmatpush1.msra.mxu0 %v130
    %155 = vmatprep.subr.mxu0 0.0
    %156 = vmatpush1.msra.mxu0 %v131
    %157 = vmatprep.subr.mxu0 0.0
    %158 = vmatpush1.msra.mxu0 %v132
    %159 = vmatprep.subr.mxu0 0.0
    %160 = vmatpush1.msra.mxu0 %v133
    %161 = vmatprep.subr.mxu0 0.0
    %162 = vmatpush1.msra.mxu0 %v134
    %163 = vmatprep.subr.mxu0 0.0
    %164 = vmatpush1.msra.mxu0 %v135
    %165 = vmatprep.subr.mxu0 0.0
    %166 = vmatpush1.msra.mxu0 %v136
    %167 = vmatprep.subr.mxu0 0.0
    %168 = vmatpush1.msra.mxu0 0.0
    %169 = vmatprep.subr.mxu0 0.0
    %170 = vmatpush1.msra.mxu0 0.0
    %171 = vmatprep.subr.mxu0 0.0
    %172 = vmatpush1.msra.mxu0 0.0
    %173 = vmatprep.subr.mxu0 0.0
    %174 = vmatpush1.msra.mxu0 0.0
    %175 = vmatprep.subr.mxu0 0.0
    %176 = vmatpush1.msra.mxu0 0.0
    %177 = vmatprep.subr.mxu0 0.0
    %178 = vmatpush1.msra.mxu0 0.0
    %179 = vmatprep.subr.mxu0 0.0
    %180 = vmatpush1.msra.mxu0 0.0
    %181 = vmatprep.subr.mxu0 0.0
    %182 = vmatpush1.msra.mxu0 0.0
    %183 = vmatprep.subr.mxu0 0.0
    %184 = vmatpush1.msra.mxu0 0.0
    %185 = vmatprep.subr.mxu0 0.0
    %186 = vmatpush1.msra.mxu0 0.0
    %187 = vmatprep.subr.mxu0 0.0
    %188 = vmatpush1.msra.mxu0 0.0
    %189 = vmatprep.subr.mxu0 0.0
    %190 = vmatpush1.msra.mxu0 0.0
    %191 = vmatprep.subr.mxu0 0.0
    %192 = vmatpush1.msra.mxu0 0.0
    %193 = vmatprep.subr.mxu0 0.0
    %194 = vmatpush1.msra.mxu0 0.0
    %195 = vmatprep.subr.mxu0 0.0
    %196 = vmatpush1.msra.mxu0 0.0
    %197 = vmatprep.subr.mxu0 0.0
    %198 = vmatpush1.msra.mxu0 0.0
    %199 = vmatprep.subr.mxu0 0.0
    %200 = vmatpush1.msra.mxu0 0.0
    %201 = vmatprep.subr.mxu0 0.0
    %202 = vmatpush1.msra.mxu0 0.0
    %203 = vmatprep.subr.mxu0 0.0
    %204 = vmatpush1.msra.mxu0 0.0
    %205 = vmatprep.subr.mxu0 0.0
    %206 = vmatpush1.msra.mxu0 0.0
    %207 = vmatprep.subr.mxu0 0.0
    %208 = vmatpush1.msra.mxu0 0.0
    %209 = vmatprep.subr.mxu0 0.0
    %210 = vmatpush1.msra.mxu0 0.0
    %211 = vmatprep.subr.mxu0 0.0
    %212 = vmatpush1.msra.mxu0 0.0
    %213 = vmatprep.subr.mxu0 0.0
    %214 = vmatpush1.msra.mxu0 0.0
    %215 = vmatprep.mubr.f32.mxu0 0.0
    %216 = vmatmul.mubr.f32.gmra.mrb[0].mxu0 %v146
    %v217 = vpop.f32.mrb[0].mxu0
    %v218 = vadd.f32 %v142, %v217
    %v219 = vpop.f32.mrb[0].mxu0
    %220 = vmatprep.mubr.f32.mxu0 0.0
    %221 = vmatmul.mubr.f32.gmra.mrb[0].mxu0 %v149
    %v222 = vpop.f32.mrb[0].mxu0
    %v223 = vadd.f32 %v142, %v222
    %v224 = vpop.f32.mrb[0].mxu0
    %225 = vdwg.mxu0
    %v226 = vmax.f32 %v218, 0.0
    %v227 = vmax.f32 %v223, 0.0
    %v228 = vld [vmem:[%s6] sm:$0x1]
    %v230 = vlaneseq
    %v231 = vshrl.u32 %v230, 7
    %v232 = vsub.s32 0, %v231
    %v233 = vrot.slane %v228, %v232
    %v235 = vmul.f32 %v226, %v233
    %v236 = vmul.f32 %v227, %v233
    %v237 = vsel %vm45, %v235, 0.0
    %238 = vadd.xlane.f32.xlu0 %v237
    %v239 = vpop.xlane.xlu0 %238
    %v240 = vsel %vm45, %v236, 0.0
    %241 = vadd.xlane.f32.xlu0 %v240
    %v242 = vpop.xlane.xlu0 %241
    %v243 = vld [vmem:[#allocation2] sm:$0x1]
    %v245 = vlaneseq
    %v246 = vshrl.u32 %v245, 7
    %v247 = vsub.s32 0, %v246
    %v248 = vrot.slane %v243, %v247
    %v250 = vadd.f32 %v239, %v248
    %v251 = vadd.f32 %v242, %v248
    %v252 = vld [vmem:[%s1] sm:$0xff]
    %v253 = vld [vmem:[%s1 + $0x8] sm:$0xff]
    %v254 = vsub.f32 %v250, %v252
    %v255 = vsub.f32 %v251, %v253
    %v256 = vmul.f32 %v254, %v254
    %v257 = vmul.f32 %v255, %v255
    %vm258 = vcmask 7168
    %v259 = vsel %vm258, %v256, 0.0
    %v260 = vsel %vm258, %v257, 0.0
    %v261 = vadd.f32 %v259, %v260
    %262 = vadd.xlane.f32.xlu0 %v261
    %v263 = vpop.xlane.xlu0 %262
    %v264 = vrot.slane %v263, 4
    %v265 = vadd.f32 %v263, %v264
    %v266 = vrot.slane %v265, 2
    %v267 = vadd.f32 %v265, %v266
    %v268 = vrot.slane %v267, 1
    %v269 = vadd.f32 %v267, %v268
    %s270 = vtos %v269
    %v271 = vstv %s270
    %272 = vst [vmem:[#allocation3] sm:$0xff] %v271
    // Predicated region
    $region34: #{tpu_custom_call.1} parent=1 // pred_check
      _
    $region35: #{tpu_custom_call.1} parent=1 // pred_check_branch
      %274 = sbr.rel (0) target = $region37
    $region36: #{tpu_custom_call.1} parent=1 // pred_region
      %s276 = ssub.s32 128, 128
      %277 = vsyncadd [#allocation4], %s276
      %s279 = sshll.u32 [#allocation3], 4
      %s280 = int_to_ptr.vmem [resolvable:$true] %s279
      %282 = dma.vmem_to_hbm [thread:$0]  %s280, 128, %s8, [#allocation4]
    $region37: #{tpu_custom_call.1} parent=1 // pred_fallthru
      _
    // Predicated region
    $region38: #{tpu_custom_call.1} parent=1 // pred_check
      _
    $region39: #{tpu_custom_call.1} parent=1 // pred_check_branch
      %284 = sbr.rel (0) target = $region41
    $region40: #{tpu_custom_call.1} parent=1 // pred_region
      %285 = dma.done [#allocation4], 128
    $region41: #{tpu_custom_call.1} parent=1 // pred_fallthru
      _
    %286 = vsyncpa [#allocation4], 1

</llo_original>
